<compile_context>
chip_gen: v7x
topology: tpu7x:2x2x1
jax: 0.10.0
libtpu: 0.0.40
codegen_flags: <defaults>
</compile_context>

<pallas_src>
import functools

import jax
import jax.numpy as jnp
from jax import lax
from jax.experimental import pallas as pl
from jax.experimental.pallas import tpu as pltpu


def _round_up(x, m):
    return ((x + m - 1) // m) * m


def _cdiv(a, b):
    return (a + b - 1) // b


def _gelu_exact(x):
    # PyTorch / BERT ACT2FN["gelu"]: x * 0.5 * (1 + erf(x / sqrt(2)))
    return x * 0.5 * (1.0 + lax.erf(x * jnp.float32(0.7071067811865476)))


def _bspec(shape, index_map, *, buffers=None):
    """BlockSpec helper; only touches pipeline_mode when explicitly requested."""
    if buffers is None:
        return pl.BlockSpec(shape, index_map)
    return pl.BlockSpec(shape, index_map, pipeline_mode=pl.Buffered(buffers))


# ----------------------------- LM prediction head -----------------------------
def lm_head_kernel(x_ref, w1_ref, b1_ref, g_ref, beta_ref, wdec_ref, bdec_ref,
                   out_ref, h_ref):
    j = pl.program_id(1)  # vocab-tile index (innermost, "arbitrary")

    # dense + gelu + LayerNorm computed ONCE per row tile; the bf16 result is
    # cached in VMEM scratch and reused for every vocab tile.
    # NOTE: this caching is only valid while the row axis is the OUTER grid
    # dimension and the vocab axis is innermost / "arbitrary".
    @pl.when(j == 0)
    def _():
        h = jnp.dot(x_ref[...], w1_ref[...], preferred_element_type=jnp.float32)
        h = h + b1_ref[...]
        h = _gelu_exact(h)
        # One-pass LayerNorm statistics: var = E[h^2] - mean^2 (clamped >= 0).
        mean = jnp.mean(h, axis=-1, keepdims=True)
        var = jnp.maximum(
            jnp.mean(h * h, axis=-1, keepdims=True) - mean * mean, 0.0)
        h = (h - mean) * lax.rsqrt(var + jnp.float32(1e-12))
        h_ref[...] = (h * g_ref[...] + beta_ref[...]).astype(h_ref.dtype)

    # Decoder: (tm, H) @ (H, tv) on the MXU, bf16 inputs / f32 accumulation.
    acc = jnp.dot(h_ref[...], wdec_ref[...], preferred_element_type=jnp.float32)
    out_ref[...] = (acc + bdec_ref[...]).astype(out_ref.dtype)


def prepare_params(params, *, block_v=512):
    """One-time weight prep (call OUTSIDE jit): bf16 casts + vocab padding.

    Hoists the ~H*V decoder-weight convert/pad pass out of every forward call.
    Pass the same block_v to the forward so the padding matches the vocab tile.
    """
    H, V = params["decoder_w_t"].shape
    tv = min(block_v, _round_up(V, 128))
    Vp = _round_up(V, tv)
    wdec = params["decoder_w_t"].astype(jnp.bfloat16)
    bdec = params["decoder_bias"].astype(jnp.float32)
    if Vp != V:
        wdec = jnp.pad(wdec, ((0, 0), (0, Vp - V)))
        bdec = jnp.pad(bdec, (0, Vp - V))
    out = dict(params)
    out["transform_w_t"] = params["transform_w_t"].astype(jnp.bfloat16)
    out["decoder_w_t"] = wdec
    out["decoder_bias"] = bdec
    return out


def lm_prediction_head(seq_out, w1_t, b1, gamma, beta, wdec_t, dec_bias, *,
                       vocab_size=None, block_m=1024, block_v=512,
                       out_dtype=jnp.bfloat16, single_buffer_consts=True):
    """Fused BertLMPredictionHead forward (dense -> gelu -> LN -> decoder + bias).

    Weights are stored pre-transposed: w1_t (H, H), wdec_t (H, V[p]) so the
    kernel computes x @ W.  Call prepare_params() once at init so the decoder
    weight arrives here already bf16 / vocab-padded (the casts/pads below then
    become no-ops).  Tuning: block_v multiple of 256 on v6e/v7x (128-alignment
    suffices on v5e); block_m ~512 on v5e, 1024+ on v6e/v7x.
    """
    B, S, H = seq_out.shape
    Vp_in = wdec_t.shape[1]
    V = Vp_in if vocab_size is None else vocab_size
    N = B * S

    x = seq_out.reshape(N, H)
    if x.dtype != jnp.bfloat16:
        x = x.astype(jnp.bfloat16)
    if w1_t.dtype != jnp.bfloat16:
        w1_t = w1_t.astype(jnp.bfloat16)

    # --- tile sizes ------------------------------------------------------
    tm = min(block_m, _round_up(N, 8))
    # Keep >= 2 row tiles for large problems so the "parallel" row axis can
    # shard across v7x's two TensorCores (and megacore on v6e where applicable).
    if N > 256 and _cdiv(N, tm) < 2:
        tm = _round_up(_cdiv(N, 2), 256)
    tv = min(block_v, _round_up(Vp_in, 128))
    Np = _round_up(N, tm)
    Vp = _round_up(Vp_in, tv)

    if Np != N:
        x = jnp.pad(x, ((0, Np - N), (0, 0)))

    # Fallback path when prepare_params() wasn't used (no-ops otherwise).
    wdec = wdec_t if wdec_t.dtype == jnp.bfloat16 else wdec_t.astype(jnp.bfloat16)
    bdec = dec_bias.astype(jnp.float32)
    if Vp != Vp_in:
        wdec = jnp.pad(wdec, ((0, 0), (0, Vp - Vp_in)))
        bdec = jnp.pad(bdec, (0, Vp - Vp_in))

    out_bytes = jnp.dtype(out_dtype).itemsize
    cbuf = 1 if single_buffer_consts else 2

    # VMEM footprint of the pipeline (buffers per operand) + scratch.
    vmem_need = (
        2 * tm * H * 2             # x tile (bf16), double-buffered
        + cbuf * H * H * 2         # transform weight (bf16)
        + cbuf * 3 * H * 4         # transform bias / LN gamma / LN beta (f32)
        + 2 * H * tv * 2           # decoder weight tile (bf16), double-buffered
        + 2 * tv * 4               # decoder bias tile
        + 2 * tm * tv * out_bytes  # output tile
        + tm * H * 2               # cached transform scratch (bf16)
    )
    # Always set the scoped-VMEM limit from the actual footprint (v5e's default
    # is only 16 MiB).  Clamp to 64 MiB so it is valid on every generation
    # (v7x physical VMEM per TC is 64 MiB).
    vmem_limit = int(max(32 << 20, min(vmem_need + (4 << 20), 64 << 20)))

    n_row_tiles = Np // tm
    cost = pl.CostEstimate(
        flops=2 * Np * H * (H + Vp),
        transcendentals=Np * H,             # erf in gelu
        bytes_accessed=(
            Np * H * 2                      # x (bf16), streamed once
            + H * H * 2                     # transform weight (bf16)
            + n_row_tiles * H * Vp * 2      # decoder weight, re-streamed per row tile
            + Np * Vp * out_bytes           # logits
            + (3 * H + Vp) * 4),            # biases / LN params (f32)
    )

    cb = 1 if single_buffer_consts else None
    out = pl.pallas_call(
        lm_head_kernel,
        out_shape=jax.ShapeDtypeStruct((Np, Vp), out_dtype),
        grid_spec=pltpu.PrefetchScalarGridSpec(
            num_scalar_prefetch=0,
            grid=(Np // tm, Vp // tv),
            in_specs=[
                pl.BlockSpec((tm, H), lambda i, j: (i, 0)),        # x rows
                _bspec((H, H), lambda i, j: (0, 0), buffers=cb),   # transform weight
                _bspec((1, H), lambda i, j: (0, 0), buffers=cb),   # transform bias
                _bspec((1, H), lambda i, j: (0, 0), buffers=cb),   # LN gamma
                _bspec((1, H), lambda i, j: (0, 0), buffers=cb),   # LN beta
                # TODO(synk): pl.Buffered(3) on the decoder-weight tile once
                # >2-deep buffering is supported on the auto-pipelined path.
                pl.BlockSpec((H, tv), lambda i, j: (0, j)),        # decoder weight tile
                pl.BlockSpec((1, tv), lambda i, j: (0, j)),        # decoder bias tile
            ],
            out_specs=pl.BlockSpec((tm, tv), lambda i, j: (i, j)),
            scratch_shapes=[pltpu.VMEM((tm, H), jnp.bfloat16)],    # cached transform
        ),
        compiler_params=pltpu.CompilerParams(
            dimension_semantics=("parallel", "arbitrary"),
            vmem_limit_bytes=vmem_limit,
        ),
        cost_estimate=cost,
    )(
        x,
        w1_t,
        b1.astype(jnp.float32).reshape(1, H),
        gamma.astype(jnp.float32).reshape(1, H),
        beta.astype(jnp.float32).reshape(1, H),
        wdec,
        bdec.reshape(1, Vp),
    )
    return out[:N, :V].reshape(B, S, V)


# ----------------------------- seq relationship head --------------------------
def seq_relationship(pooled, w_t, b):
    # Intentionally plain XLA: the 2-wide output lane dim would force masked
    # partial stores and a ~1%-occupied MXU; the op is tiny and a pallas_call
    # launch + DMA would cost more than the compute itself.
    return pooled.astype(jnp.float32) @ w_t.astype(jnp.float32) + b.astype(jnp.float32)


# ----------------------------- module wrapper ----------------------------------
def bert_pretraining_heads_without_pair(sequence_output, pooled_output, params, *,
                                        vocab_size=None, block_m=1024, block_v=512,
                                        out_dtype=jnp.bfloat16,
                                        single_buffer_consts=True):
    prediction_scores = lm_prediction_head(
        sequence_output,
        params["transform_w_t"], params["transform_b"],
        params["ln_gamma"], params["ln_beta"],
        params["decoder_w_t"], params["decoder_bias"],
        vocab_size=vocab_size, block_m=block_m, block_v=block_v,
        out_dtype=out_dtype, single_buffer_consts=single_buffer_consts,
    )
    seq_relationship_score = seq_relationship(
        pooled_output, params["seqrel_w_t"], params["seqrel_b"]
    )
    return prediction_scores, seq_relationship_score


if __name__ == "__main__":
    # Small config-implied shapes
    B, S, H, V = 2, 8, 32, 128

    key = jax.random.PRNGKey(0)
    ks = jax.random.split(key, 10)

    # Inputs
    sequence_output = jax.random.normal(ks[0], (B, S, H), dtype=jnp.float32)
    pooled_output = jax.random.normal(ks[1], (B, H), dtype=jnp.float32)

    # Parameters (weights stored transposed: (in, out))
    scale = 0.02
    params = {
        # BertPredictionHeadTransform.dense (H -> H)
        "transform_w_t": scale * jax.random.normal(ks[2], (H, H), dtype=jnp.float32),
        "transform_b": scale * jax.random.normal(ks[3], (H,), dtype=jnp.float32),
        # LayerNorm
        "ln_gamma": jnp.ones((H,), dtype=jnp.float32),
        "ln_beta": jnp.zeros((H,), dtype=jnp.float32),
        # decoder (H -> V, bias=False) + separate bias parameter (zeros in BERT)
        "decoder_w_t": scale * jax.random.normal(ks[4], (H, V), dtype=jnp.float32),
        "decoder_bias": jnp.zeros((V,), dtype=jnp.float32),
        # seq_relationship Linear (H -> 2)
        "seqrel_w_t": scale * jax.random.normal(ks[5], (H, 2), dtype=jnp.float32),
        "seqrel_b": scale * jax.random.normal(ks[6], (2,), dtype=jnp.float32),
    }

    # One-time weight prep (bf16 casts + vocab padding) hoisted OUT of the
    # jitted forward path.
    prepped = prepare_params(params, block_v=512)

    def make_fwd(single_buffer_consts):
        return jax.jit(functools.partial(
            bert_pretraining_heads_without_pair,
            vocab_size=V, block_m=1024, block_v=512,
            out_dtype=jnp.bfloat16,
            single_buffer_consts=single_buffer_consts))

    try:
        fwd = make_fwd(True)
        pred_scores, seq_rel_scores = fwd(sequence_output, pooled_output, prepped)
        jax.block_until_ready((pred_scores, seq_rel_scores))
    except Exception:
        # pl.Buffered(1) single-buffering of grid-constant operands is not
        # available on every JAX/Pallas version; fall back to the default
        # double buffering (identical results, ~2 MiB more VMEM at H=1024).
        fwd = make_fwd(False)
        pred_scores, seq_rel_scores = fwd(sequence_output, pooled_output, prepped)
        jax.block_until_ready((pred_scores, seq_rel_scores))

    # Sanity check against a pure-JAX f32 reference (kernel uses bf16 inputs /
    # bf16 output with f32 accumulation, hence the relaxed tolerance).
    x = sequence_output.reshape(B * S, H)
    h = x @ params["transform_w_t"] + params["transform_b"]
    h = h * 0.5 * (1.0 + lax.erf(h / jnp.sqrt(2.0)))
    mu = h.mean(-1, keepdims=True)
    var = ((h - mu) ** 2).mean(-1, keepdims=True)
    h = (h - mu) * lax.rsqrt(var + 1e-12) * params["ln_gamma"] + params["ln_beta"]
    ref_pred = (h @ params["decoder_w_t"] + params["decoder_bias"]).reshape(B, S, V)
    ref_rel = pooled_output @ params["seqrel_w_t"] + params["seqrel_b"]

    assert pred_scores.shape == (B, S, V)
    assert seq_rel_scores.shape == (B, 2)
    pred_f32 = pred_scores.astype(jnp.float32)
    max_err = float(jnp.max(jnp.abs(pred_f32 - ref_pred)))
    assert jnp.allclose(pred_f32, ref_pred, atol=2e-2, rtol=2e-2), max_err
    assert jnp.allclose(seq_rel_scores, ref_rel, atol=1e-5, rtol=1e-5)

    print("KERNEL_OK")
</pallas_src>

<mosaic_0001>
module attributes {stable_mosaic.version = 11 : i64} {
  func.func @lm_head_kernel(%arg0: i32, %arg1: i32, %arg2: memref<16x32xbf16, #tpu.memory_space<vmem>>, %arg3: memref<32x32xbf16, #tpu.memory_space<vmem>>, %arg4: memref<1x32xf32, #tpu.memory_space<vmem>>, %arg5: memref<1x32xf32, #tpu.memory_space<vmem>>, %arg6: memref<1x32xf32, #tpu.memory_space<vmem>>, %arg7: memref<32x128xbf16, #tpu.memory_space<vmem>>, %arg8: memref<1x128xf32, #tpu.memory_space<vmem>>, %arg9: memref<16x128xbf16, #tpu.memory_space<vmem>>, %arg10: memref<16x32xbf16, #tpu.memory_space<vmem>>) attributes {dimension_semantics = [#tpu.dimension_semantics<parallel>, #tpu.dimension_semantics<arbitrary>], iteration_bounds = array<i64: 1, 1>, scalar_prefetch = 0 : i64, scratch_operands = 1 : i64, tpu.core_type = #tpu.core_type<tc>, window_params = [{transform_indices = @transform_0, window_bounds = array<i64: 16, 32>}, {pipeline_mode = #tpu.pipeline_mode<synchronous>, transform_indices = @transform_1, window_bounds = array<i64: 32, 32>}, {pipeline_mode = #tpu.pipeline_mode<synchronous>, transform_indices = @transform_2, window_bounds = array<i64: 1, 32>}, {pipeline_mode = #tpu.pipeline_mode<synchronous>, transform_indices = @transform_3, window_bounds = array<i64: 1, 32>}, {pipeline_mode = #tpu.pipeline_mode<synchronous>, transform_indices = @transform_4, window_bounds = array<i64: 1, 32>}, {transform_indices = @transform_5, window_bounds = array<i64: 32, 128>}, {transform_indices = @transform_6, window_bounds = array<i64: 1, 128>}, {transform_indices = @transform_7, window_bounds = array<i64: 16, 128>}]} {
    %c0_i32 = arith.constant 0 : i32
    %0 = arith.cmpi eq, %arg1, %c0_i32 : i32
    %1 = arith.extui %0 : i1 to i32
    %c0_i32_0 = arith.constant 0 : i32
    %2 = arith.cmpi ne, %1, %c0_i32_0 : i32
    scf.if %2 {
      %c0_8 = arith.constant 0 : index
      %c0_9 = arith.constant 0 : index
      %11 = vector.load %arg2[%c0_8, %c0_9] : memref<16x32xbf16, #tpu.memory_space<vmem>>, vector<16x32xbf16>
      %c0_10 = arith.constant 0 : index
      %c0_11 = arith.constant 0 : index
      %12 = vector.load %arg3[%c0_10, %c0_11] : memref<32x32xbf16, #tpu.memory_space<vmem>>, vector<32x32xbf16>
      %cst_12 = arith.constant dense<0.000000e+00> : vector<16x32xf32>
      %13 = tpu.matmul %11, %12, %cst_12 {dimension_numbers = #tpu.dot_dimension_numbers<[1], [0], [0], [1], [0, 0, 1, 1], [], []>} : vector<16x32xbf16>, vector<32x32xbf16>, vector<16x32xf32> -> vector<16x32xf32>
      %c0_13 = arith.constant 0 : index
      %c0_14 = arith.constant 0 : index
      %14 = vector.load %arg4[%c0_13, %c0_14] : memref<1x32xf32, #tpu.memory_space<vmem>>, vector<1x32xf32>
      %15 = vector.broadcast %14 : vector<1x32xf32> to vector<16x32xf32>
      %16 = arith.addf %13, %15 : vector<16x32xf32>
      %cst_15 = arith.constant 5.000000e-01 : f32
      %17 = vector.broadcast %cst_15 : f32 to vector<16x32xf32>
      %18 = arith.mulf %16, %17 : vector<16x32xf32>
      %cst_16 = arith.constant 0.707106769 : f32
      %19 = vector.broadcast %cst_16 : f32 to vector<16x32xf32>
      %20 = arith.mulf %16, %19 : vector<16x32xf32>
      %21 = math.erf %20 : vector<16x32xf32>
      %cst_17 = arith.constant 1.000000e+00 : f32
      %22 = vector.broadcast %cst_17 : f32 to vector<16x32xf32>
      %23 = arith.addf %22, %21 : vector<16x32xf32>
      %24 = arith.mulf %18, %23 : vector<16x32xf32>
      %cst_18 = arith.constant dense<0.000000e+00> : vector<16xf32>
      %25 = vector.multi_reduction <add>, %24, %cst_18 [1] : vector<16x32xf32> to vector<16xf32>
      %26 = vector.shape_cast %25 : vector<16xf32> to vector<16x1xf32>
      %cst_19 = arith.constant 3.200000e+01 : f32
      %27 = vector.broadcast %cst_19 : f32 to vector<16x1xf32>
      %28 = arith.divf %26, %27 : vector<16x1xf32>
      %29 = arith.mulf %24, %24 : vector<16x32xf32>
      %cst_20 = arith.constant dense<0.000000e+00> : vector<16xf32>
      %30 = vector.multi_reduction <add>, %29, %cst_20 [1] : vector<16x32xf32> to vector<16xf32>
      %31 = vector.shape_cast %30 : vector<16xf32> to vector<16x1xf32>
      %cst_21 = arith.constant 3.200000e+01 : f32
      %32 = vector.broadcast %cst_21 : f32 to vector<16x1xf32>
      %33 = arith.divf %31, %32 : vector<16x1xf32>
      %34 = arith.mulf %28, %28 : vector<16x1xf32>
      %35 = arith.subf %33, %34 : vector<16x1xf32>
      %cst_22 = arith.constant 0.000000e+00 : f32
      %36 = vector.broadcast %cst_22 : f32 to vector<16x1xf32>
      %37 = arith.maximumf %35, %36 : vector<16x1xf32>
      %38 = vector.broadcast %28 : vector<16x1xf32> to vector<16x32xf32>
      %39 = arith.subf %24, %38 : vector<16x32xf32>
      %cst_23 = arith.constant 9.99999996E-13 : f32
      %40 = vector.broadcast %cst_23 : f32 to vector<16x1xf32>
      %41 = arith.addf %37, %40 : vector<16x1xf32>
      %42 = math.rsqrt %41 : vector<16x1xf32>
      %43 = vector.broadcast %42 : vector<16x1xf32> to vector<16x32xf32>
      %44 = arith.mulf %39, %43 : vector<16x32xf32>
      %c0_24 = arith.constant 0 : index
      %c0_25 = arith.constant 0 : index
      %45 = vector.load %arg5[%c0_24, %c0_25] : memref<1x32xf32, #tpu.memory_space<vmem>>, vector<1x32xf32>
      %46 = vector.broadcast %45 : vector<1x32xf32> to vector<16x32xf32>
      %47 = arith.mulf %44, %46 : vector<16x32xf32>
      %c0_26 = arith.constant 0 : index
      %c0_27 = arith.constant 0 : index
      %48 = vector.load %arg6[%c0_26, %c0_27] : memref<1x32xf32, #tpu.memory_space<vmem>>, vector<1x32xf32>
      %49 = vector.broadcast %48 : vector<1x32xf32> to vector<16x32xf32>
      %50 = arith.addf %47, %49 : vector<16x32xf32>
      %51 = arith.truncf %50 : vector<16x32xf32> to vector<16x32xbf16>
      %c0_28 = arith.constant 0 : index
      %c0_29 = arith.constant 0 : index
      %52 = vector.load %arg10[%c0_28, %c0_29] : memref<16x32xbf16, #tpu.memory_space<vmem>>, vector<16x32xbf16>
      tpu.vector_store %arg10[%c0_28, %c0_29], %51 {strides = array<i32>} : memref<16x32xbf16, #tpu.memory_space<vmem>>, vector<16x32xbf16>,
    } else {
    }
    %c0 = arith.constant 0 : index
    %c0_1 = arith.constant 0 : index
    %3 = vector.load %arg10[%c0, %c0_1] : memref<16x32xbf16, #tpu.memory_space<vmem>>, vector<16x32xbf16>
    %c0_2 = arith.constant 0 : index
    %c0_3 = arith.constant 0 : index
    %4 = vector.load %arg7[%c0_2, %c0_3] : memref<32x128xbf16, #tpu.memory_space<vmem>>, vector<32x128xbf16>
    %cst = arith.constant dense<0.000000e+00> : vector<16x128xf32>
    %5 = tpu.matmul %3, %4, %cst {dimension_numbers = #tpu.dot_dimension_numbers<[1], [0], [0], [1], [0, 0, 1, 1], [], []>} : vector<16x32xbf16>, vector<32x128xbf16>, vector<16x128xf32> -> vector<16x128xf32>
    %c0_4 = arith.constant 0 : index
    %c0_5 = arith.constant 0 : index
    %6 = vector.load %arg8[%c0_4, %c0_5] : memref<1x128xf32, #tpu.memory_space<vmem>>, vector<1x128xf32>
    %7 = vector.broadcast %6 : vector<1x128xf32> to vector<16x128xf32>
    %8 = arith.addf %5, %7 : vector<16x128xf32>
    %9 = arith.truncf %8 : vector<16x128xf32> to vector<16x128xbf16>
    %c0_6 = arith.constant 0 : index
    %c0_7 = arith.constant 0 : index
    %10 = vector.load %arg9[%c0_6, %c0_7] : memref<16x128xbf16, #tpu.memory_space<vmem>>, vector<16x128xbf16>
    tpu.vector_store %arg9[%c0_6, %c0_7], %9 {strides = array<i32>} : memref<16x128xbf16, #tpu.memory_space<vmem>>, vector<16x128xbf16>,
    return
  }
  func.func @transform_0(%arg0: i32, %arg1: i32) -> (i32, i32) {
    %c0_i32 = arith.constant 0 : i32
    %c0_i32_0 = arith.constant 0 : i32
    return %arg0, %c0_i32 : i32, i32
  }
  func.func @transform_1(%arg0: i32, %arg1: i32) -> (i32, i32) {
    %c0_i32 = arith.constant 0 : i32
    %c0_i32_0 = arith.constant 0 : i32
    %c0_i32_1 = arith.constant 0 : i32
    return %c0_i32, %c0_i32_0 : i32, i32
  }
  func.func @transform_2(%arg0: i32, %arg1: i32) -> (i32, i32) {
    %c0_i32 = arith.constant 0 : i32
    %c0_i32_0 = arith.constant 0 : i32
    %c0_i32_1 = arith.constant 0 : i32
    return %c0_i32, %c0_i32_0 : i32, i32
  }
  func.func @transform_3(%arg0: i32, %arg1: i32) -> (i32, i32) {
    %c0_i32 = arith.constant 0 : i32
    %c0_i32_0 = arith.constant 0 : i32
    %c0_i32_1 = arith.constant 0 : i32
    return %c0_i32, %c0_i32_0 : i32, i32
  }
  func.func @transform_4(%arg0: i32, %arg1: i32) -> (i32, i32) {
    %c0_i32 = arith.constant 0 : i32
    %c0_i32_0 = arith.constant 0 : i32
    %c0_i32_1 = arith.constant 0 : i32
    return %c0_i32, %c0_i32_0 : i32, i32
  }
  func.func @transform_5(%arg0: i32, %arg1: i32) -> (i32, i32) {
    %c0_i32 = arith.constant 0 : i32
    %c0_i32_0 = arith.constant 0 : i32
    return %c0_i32, %arg1 : i32, i32
  }
  func.func @transform_6(%arg0: i32, %arg1: i32) -> (i32, i32) {
    %c0_i32 = arith.constant 0 : i32
    %c0_i32_0 = arith.constant 0 : i32
    return %c0_i32, %arg1 : i32, i32
  }
  func.func @transform_7(%arg0: i32, %arg1: i32) -> (i32, i32) {
    %c0_i32 = arith.constant 0 : i32
    return %arg0, %arg1 : i32, i32
  }
}

module attributes {stable_mosaic.version = 11 : i64} {
  func.func @lm_head_kernel(%arg0: i32, %arg1: i32, %arg2: memref<16x32xbf16, #tpu.memory_space<vmem>>, %arg3: memref<32x32xbf16, #tpu.memory_space<vmem>>, %arg4: memref<1x32xf32, #tpu.memory_space<vmem>>, %arg5: memref<1x32xf32, #tpu.memory_space<vmem>>, %arg6: memref<1x32xf32, #tpu.memory_space<vmem>>, %arg7: memref<32x128xbf16, #tpu.memory_space<vmem>>, %arg8: memref<1x128xf32, #tpu.memory_space<vmem>>, %arg9: memref<16x128xbf16, #tpu.memory_space<vmem>>, %arg10: memref<16x32xbf16, #tpu.memory_space<vmem>>) attributes {dimension_semantics = [#tpu.dimension_semantics<parallel>, #tpu.dimension_semantics<arbitrary>], iteration_bounds = array<i64: 1, 1>, scalar_prefetch = 0 : i64, scratch_operands = 1 : i64, tpu.core_type = #tpu.core_type<tc>, window_params = [{transform_indices = @transform_0, window_bounds = array<i64: 16, 32>}, {pipeline_mode = #tpu.pipeline_mode<synchronous>, transform_indices = @transform_1, window_bounds = array<i64: 32, 32>}, {pipeline_mode = #tpu.pipeline_mode<synchronous>, transform_indices = @transform_2, window_bounds = array<i64: 1, 32>}, {pipeline_mode = #tpu.pipeline_mode<synchronous>, transform_indices = @transform_3, window_bounds = array<i64: 1, 32>}, {pipeline_mode = #tpu.pipeline_mode<synchronous>, transform_indices = @transform_4, window_bounds = array<i64: 1, 32>}, {transform_indices = @transform_5, window_bounds = array<i64: 32, 128>}, {transform_indices = @transform_6, window_bounds = array<i64: 1, 128>}, {transform_indices = @transform_7, window_bounds = array<i64: 16, 128>}]} {
    %c0_i32 = arith.constant 0 : i32
    %0 = arith.cmpi eq, %arg1, %c0_i32 : i32
    %1 = arith.extui %0 : i1 to i32
    %c0_i32_0 = arith.constant 0 : i32
    %2 = arith.cmpi ne, %1, %c0_i32_0 : i32
    scf.if %2 {
      %c0_8 = arith.constant 0 : index
      %c0_9 = arith.constant 0 : index
      %11 = vector.load %arg2[%c0_8, %c0_9] : memref<16x32xbf16, #tpu.memory_space<vmem>>, vector<16x32xbf16>
      %c0_10 = arith.constant 0 : index
      %c0_11 = arith.constant 0 : index
      %12 = vector.load %arg3[%c0_10, %c0_11] : memref<32x32xbf16, #tpu.memory_space<vmem>>, vector<32x32xbf16>
      %cst_12 = arith.constant dense<0.000000e+00> : vector<16x32xf32>
      %13 = tpu.matmul %11, %12, %cst_12 {dimension_numbers = #tpu.dot_dimension_numbers<[1], [0], [0], [1], [0, 0, 1, 1], [], []>} : vector<16x32xbf16>, vector<32x32xbf16>, vector<16x32xf32> -> vector<16x32xf32>
      %c0_13 = arith.constant 0 : index
      %c0_14 = arith.constant 0 : index
      %14 = vector.load %arg4[%c0_13, %c0_14] : memref<1x32xf32, #tpu.memory_space<vmem>>, vector<1x32xf32>
      %15 = vector.broadcast %14 : vector<1x32xf32> to vector<16x32xf32>
      %16 = arith.addf %13, %15 : vector<16x32xf32>
      %cst_15 = arith.constant 5.000000e-01 : f32
      %17 = vector.broadcast %cst_15 : f32 to vector<16x32xf32>
      %18 = arith.mulf %16, %17 : vector<16x32xf32>
      %cst_16 = arith.constant 0.707106769 : f32
      %19 = vector.broadcast %cst_16 : f32 to vector<16x32xf32>
      %20 = arith.mulf %16, %19 : vector<16x32xf32>
      %21 = math.erf %20 : vector<16x32xf32>
      %cst_17 = arith.constant 1.000000e+00 : f32
      %22 = vector.broadcast %cst_17 : f32 to vector<16x32xf32>
      %23 = arith.addf %22, %21 : vector<16x32xf32>
      %24 = arith.mulf %18, %23 : vector<16x32xf32>
      %cst_18 = arith.constant dense<0.000000e+00> : vector<16xf32>
      %25 = vector.multi_reduction <add>, %24, %cst_18 [1] : vector<16x32xf32> to vector<16xf32>
      %26 = vector.shape_cast %25 : vector<16xf32> to vector<16x1xf32>
      %cst_19 = arith.constant 3.200000e+01 : f32
      %27 = vector.broadcast %cst_19 : f32 to vector<16x1xf32>
      %28 = arith.divf %26, %27 : vector<16x1xf32>
      %29 = arith.mulf %24, %24 : vector<16x32xf32>
      %cst_20 = arith.constant dense<0.000000e+00> : vector<16xf32>
      %30 = vector.multi_reduction <add>, %29, %cst_20 [1] : vector<16x32xf32> to vector<16xf32>
      %31 = vector.shape_cast %30 : vector<16xf32> to vector<16x1xf32>
      %cst_21 = arith.constant 3.200000e+01 : f32
      %32 = vector.broadcast %cst_21 : f32 to vector<16x1xf32>
      %33 = arith.divf %31, %32 : vector<16x1xf32>
      %34 = arith.mulf %28, %28 : vector<16x1xf32>
      %35 = arith.subf %33, %34 : vector<16x1xf32>
      %cst_22 = arith.constant 0.000000e+00 : f32
      %36 = vector.broadcast %cst_22 : f32 to vector<16x1xf32>
      %37 = arith.maximumf %35, %36 : vector<16x1xf32>
      %38 = vector.broadcast %28 : vector<16x1xf32> to vector<16x32xf32>
      %39 = arith.subf %24, %38 : vector<16x32xf32>
      %cst_23 = arith.constant 9.99999996E-13 : f32
      %40 = vector.broadcast %cst_23 : f32 to vector<16x1xf32>
      %41 = arith.addf %37, %40 : vector<16x1xf32>
      %42 = math.rsqrt %41 : vector<16x1xf32>
      %43 = vector.broadcast %42 : vector<16x1xf32> to vector<16x32xf32>
      %44 = arith.mulf %39, %43 : vector<16x32xf32>
      %c0_24 = arith.constant 0 : index
      %c0_25 = arith.constant 0 : index
      %45 = vector.load %arg5[%c0_24, %c0_25] : memref<1x32xf32, #tpu.memory_space<vmem>>, vector<1x32xf32>
      %46 = vector.broadcast %45 : vector<1x32xf32> to vector<16x32xf32>
      %47 = arith.mulf %44, %46 : vector<16x32xf32>
      %c0_26 = arith.constant 0 : index
      %c0_27 = arith.constant 0 : index
      %48 = vector.load %arg6[%c0_26, %c0_27] : memref<1x32xf32, #tpu.memory_space<vmem>>, vector<1x32xf32>
      %49 = vector.broadcast %48 : vector<1x32xf32> to vector<16x32xf32>
      %50 = arith.addf %47, %49 : vector<16x32xf32>
      %51 = arith.truncf %50 : vector<16x32xf32> to vector<16x32xbf16>
      %c0_28 = arith.constant 0 : index
      %c0_29 = arith.constant 0 : index
      %52 = vector.load %arg10[%c0_28, %c0_29] : memref<16x32xbf16, #tpu.memory_space<vmem>>, vector<16x32xbf16>
      tpu.vector_store %arg10[%c0_28, %c0_29], %51 {strides = array<i32>} : memref<16x32xbf16, #tpu.memory_space<vmem>>, vector<16x32xbf16>,
    } else {
    }
    %c0 = arith.constant 0 : index
    %c0_1 = arith.constant 0 : index
    %3 = vector.load %arg10[%c0, %c0_1] : memref<16x32xbf16, #tpu.memory_space<vmem>>, vector<16x32xbf16>
    %c0_2 = arith.constant 0 : index
    %c0_3 = arith.constant 0 : index
    %4 = vector.load %arg7[%c0_2, %c0_3] : memref<32x128xbf16, #tpu.memory_space<vmem>>, vector<32x128xbf16>
    %cst = arith.constant dense<0.000000e+00> : vector<16x128xf32>
    %5 = tpu.matmul %3, %4, %cst {dimension_numbers = #tpu.dot_dimension_numbers<[1], [0], [0], [1], [0, 0, 1, 1], [], []>} : vector<16x32xbf16>, vector<32x128xbf16>, vector<16x128xf32> -> vector<16x128xf32>
    %c0_4 = arith.constant 0 : index
    %c0_5 = arith.constant 0 : index
    %6 = vector.load %arg8[%c0_4, %c0_5] : memref<1x128xf32, #tpu.memory_space<vmem>>, vector<1x128xf32>
    %7 = vector.broadcast %6 : vector<1x128xf32> to vector<16x128xf32>
    %8 = arith.addf %5, %7 : vector<16x128xf32>
    %9 = arith.truncf %8 : vector<16x128xf32> to vector<16x128xbf16>
    %c0_6 = arith.constant 0 : index
    %c0_7 = arith.constant 0 : index
    %10 = vector.load %arg9[%c0_6, %c0_7] : memref<16x128xbf16, #tpu.memory_space<vmem>>, vector<16x128xbf16>
    tpu.vector_store %arg9[%c0_6, %c0_7], %9 {strides = array<i32>} : memref<16x128xbf16, #tpu.memory_space<vmem>>, vector<16x128xbf16>,
    return
  }
  func.func @transform_0(%arg0: i32, %arg1: i32) -> (i32, i32) {
    %c0_i32 = arith.constant 0 : i32
    %c0_i32_0 = arith.constant 0 : i32
    return %arg0, %c0_i32 : i32, i32
  }
  func.func @transform_1(%arg0: i32, %arg1: i32) -> (i32, i32) {
    %c0_i32 = arith.constant 0 : i32
    %c0_i32_0 = arith.constant 0 : i32
    %c0_i32_1 = arith.constant 0 : i32
    return %c0_i32, %c0_i32_0 : i32, i32
  }
  func.func @transform_2(%arg0: i32, %arg1: i32) -> (i32, i32) {
    %c0_i32 = arith.constant 0 : i32
    %c0_i32_0 = arith.constant 0 : i32
    %c0_i32_1 = arith.constant 0 : i32
    return %c0_i32, %c0_i32_0 : i32, i32
  }
  func.func @transform_3(%arg0: i32, %arg1: i32) -> (i32, i32) {
    %c0_i32 = arith.constant 0 : i32
    %c0_i32_0 = arith.constant 0 : i32
    %c0_i32_1 = arith.constant 0 : i32
    return %c0_i32, %c0_i32_0 : i32, i32
  }
  func.func @transform_4(%arg0: i32, %arg1: i32) -> (i32, i32) {
    %c0_i32 = arith.constant 0 : i32
    %c0_i32_0 = arith.constant 0 : i32
    %c0_i32_1 = arith.constant 0 : i32
    return %c0_i32, %c0_i32_0 : i32, i32
  }
  func.func @transform_5(%arg0: i32, %arg1: i32) -> (i32, i32) {
    %c0_i32 = arith.constant 0 : i32
    %c0_i32_0 = arith.constant 0 : i32
    return %c0_i32, %arg1 : i32, i32
  }
  func.func @transform_6(%arg0: i32, %arg1: i32) -> (i32, i32) {
    %c0_i32 = arith.constant 0 : i32
    %c0_i32_0 = arith.constant 0 : i32
    return %c0_i32, %arg1 : i32, i32
  }
  func.func @transform_7(%arg0: i32, %arg1: i32) -> (i32, i32) {
    %c0_i32 = arith.constant 0 : i32
    return %arg0, %arg1 : i32, i32
  }
}

</mosaic_0001>

<llo_original>
// kernel: bert_pretraining_heads_without_pair.1
$region0: #{bert_pretraining_heads_without_pair.1}
  #allocation0 [shape = 'u32[]', space=smem, size = 0x4, offset = 0x4, fixed_abs, tag = 'smem constant byte address 0x4 - core index']
  #allocation1 [shape = 'u32[144,128]{1,0:T(1,128)}', space=vmem, size = 0x12000, scoped, tag = 'internal scratch']
  #allocation2 [shape = 'bf16[16,32]{1,0:T(16,128)(2,1)}', space=vmem, size = 0x1000, scoped, tag = 'scratch operand']
  %s0 = inlined_call_operand.vmem [shape: bf16[16,32], index: 0, kind: input, shape index: {}]
  %s1 = inlined_call_operand.vmem [shape: bf16[32,32], index: 1, kind: input, shape index: {}]
  %s2 = inlined_call_operand.vmem [shape: f32[1,32], index: 2, kind: input, shape index: {}]
  %s3 = inlined_call_operand.vmem [shape: f32[1,32], index: 3, kind: input, shape index: {}]
  %s4 = inlined_call_operand.vmem [shape: f32[1,32], index: 4, kind: input, shape index: {}]
  %s5 = inlined_call_operand.vmem [shape: bf16[32,128], index: 5, kind: input, shape index: {}]
  %s6 = inlined_call_operand.vmem [shape: f32[1,128], index: 6, kind: input, shape index: {}]
  %s7 = inlined_call_operand.hbm [shape: bf16[16,128], index: 7, kind: output, shape index: {}]
  %s8 = sld [smem:[#allocation0]]
  $region42: #{bert_pretraining_heads_without_pair.1} parent=0
    _
  %s10 = ssub.s32 1, %s8
  %s11 = scalar_select 0, %s10, %s8
  $region1: #{bert_pretraining_heads_without_pair.1} parent=0
    #allocation3 [shape = 'u8[4096]{0}', space=vmem, size = 0x1000, scoped, tag = 'output window, operand 0, single buffered']
    #allocation4 [shape = 's32[1]{0}', space=sflag, size = 0x4, scoped, tag = 'scoped memory for bert_pretraining_heads_without_pair.1']
    %12 = vsyncpa [#allocation4], 0
    // Predicated region
    $region2: #{bert_pretraining_heads_without_pair.1} parent=1 // pred_check
      _
    $region3: #{bert_pretraining_heads_without_pair.1} parent=1 // pred_check_branch
      %14 = sbr.rel (0) target = $region5
    $region4: #{bert_pretraining_heads_without_pair.1} parent=1 // pred_region
      _
    $region5: #{bert_pretraining_heads_without_pair.1} parent=1 // pred_fallthru
      _
    // Predicated region
    $region6: #{bert_pretraining_heads_without_pair.1} parent=1 // pred_check
      _
    $region7: #{bert_pretraining_heads_without_pair.1} parent=1 // pred_check_branch
      %16 = sbr.rel (0) target = $region9
    $region8: #{bert_pretraining_heads_without_pair.1} parent=1 // pred_region
      _
    $region9: #{bert_pretraining_heads_without_pair.1} parent=1 // pred_fallthru
      _
    // Predicated region
    $region10: #{bert_pretraining_heads_without_pair.1} parent=1 // pred_check
      _
    $region11: #{bert_pretraining_heads_without_pair.1} parent=1 // pred_check_branch
      %18 = sbr.rel (0) target = $region13
    $region12: #{bert_pretraining_heads_without_pair.1} parent=1 // pred_region
      _
    $region13: #{bert_pretraining_heads_without_pair.1} parent=1 // pred_fallthru
      _
    // Predicated region
    $region14: #{bert_pretraining_heads_without_pair.1} parent=1 // pred_check
      _
    $region15: #{bert_pretraining_heads_without_pair.1} parent=1 // pred_check_branch
      %20 = sbr.rel (0) target = $region17
    $region16: #{bert_pretraining_heads_without_pair.1} parent=1 // pred_region
      _
    $region17: #{bert_pretraining_heads_without_pair.1} parent=1 // pred_fallthru
      _
    // Predicated region
    $region18: #{bert_pretraining_heads_without_pair.1} parent=1 // pred_check
      _
    $region19: #{bert_pretraining_heads_without_pair.1} parent=1 // pred_check_branch
      %22 = sbr.rel (0) target = $region21
    $region20: #{bert_pretraining_heads_without_pair.1} parent=1 // pred_region
      _
    $region21: #{bert_pretraining_heads_without_pair.1} parent=1 // pred_fallthru
      _
    // Predicated region
    $region22: #{bert_pretraining_heads_without_pair.1} parent=1 // pred_check
      _
    $region23: #{bert_pretraining_heads_without_pair.1} parent=1 // pred_check_branch
      %24 = sbr.rel (0) target = $region25
    $region24: #{bert_pretraining_heads_without_pair.1} parent=1 // pred_region
      _
    $region25: #{bert_pretraining_heads_without_pair.1} parent=1 // pred_fallthru
      _
    // Predicated region
    $region26: #{bert_pretraining_heads_without_pair.1} parent=1 // pred_check
      _
    $region27: #{bert_pretraining_heads_without_pair.1} parent=1 // pred_check_branch
      %26 = sbr.rel (0) target = $region29
    $region28: #{bert_pretraining_heads_without_pair.1} parent=1 // pred_region
      _
    $region29: #{bert_pretraining_heads_without_pair.1} parent=1 // pred_fallthru
      _
    %p28 = scmp.eq.s32.totalorder 0, 0
    // Predicated region
    $region30: #{bert_pretraining_heads_without_pair.1} parent=1 // pred_check
      %p29 = pneg %p28
    $region31: #{bert_pretraining_heads_without_pair.1} parent=1 // pred_check_branch
      %31 = sbr.rel (%p29) target = $region33
    $region32: #{bert_pretraining_heads_without_pair.1} parent=1 // pred_region
      %v32 = vld [vmem:[%s0] sm:$0xf]
      %v33 = vld [vmem:[%s0 + $0x4] sm:$0xf]
      %v34 = vld [vmem:[%s1] sm:$0xf]
      %v35 = vld [vmem:[%s1 + $0x4] sm:$0xf]
      %v36 = vld [vmem:[%s1 + $0x8] sm:$0xf]
      %v37 = vld [vmem:[%s1 + $0xc] sm:$0xf]
      %v38 = vld [vmem:[%s2] sm:$0x1]
      %v40 = vlaneseq
      %v41 = vshrl.u32 %v40, 7
      %v42 = vsub.s32 0, %v41
      %v43 = vrot.slane %v38, %v42
      %v47 = vunpack.c.l.b16 %v32
      %v48 = vunpack.c.l.b16 %v33
      %v49 = vpack.c.b16 %v48, %v47
      %v54 = vunpack.c.l.b16 %v34
      %v55 = vunpack.c.l.b16 %v35
      %v56 = vunpack.c.l.b16 %v36
      %v57 = vunpack.c.l.b16 %v37
      %v58 = vpack.c.b16 %v55, %v54
      %v59 = vpack.c.b16 %v57, %v56
      %vm62 = vcmask 261120
      %v64 = vsel %vm62, %v49, 0
      %66 = vmatprep.subr.bf16.mxu0 0
      %67 = vmatpush1.bf16.msra.mxu0 %v58
      %68 = vmatprep.subr.bf16.mxu0 0
      %69 = vmatpush1.bf16.msra.mxu0 %v59
      %70 = vmatprep.subr.bf16.mxu0 0
      %71 = vmatpush1.bf16.msra.mxu0 0
      %72 = vmatprep.subr.bf16.mxu0 0
      %73 = vmatpush1.bf16.msra.mxu0 0
      %74 = vmatprep.subr.bf16.mxu0 0
      %75 = vmatpush1.bf16.msra.mxu0 0
      %76 = vmatprep.subr.bf16.mxu0 0
      %77 = vmatpush1.bf16.msra.mxu0 0
      %78 = vmatprep.subr.bf16.mxu0 0
      %79 = vmatpush1.bf16.msra.mxu0 0
      %80 = vmatprep.subr.bf16.mxu0 0
      %81 = vmatpush1.bf16.msra.mxu0 0
      %82 = vmatprep.subr.bf16.mxu0 0
      %83 = vmatpush1.bf16.msra.mxu0 0
      %84 = vmatprep.subr.bf16.mxu0 0
      %85 = vmatpush1.bf16.msra.mxu0 0
      %86 = vmatprep.subr.bf16.mxu0 0
      %87 = vmatpush1.bf16.msra.mxu0 0
      %88 = vmatprep.subr.bf16.mxu0 0
      %89 = vmatpush1.bf16.msra.mxu0 0
      %90 = vmatprep.subr.bf16.mxu0 0
      %91 = vmatpush1.bf16.msra.mxu0 0
      %92 = vmatprep.subr.bf16.mxu0 0
      %93 = vmatpush1.bf16.msra.mxu0 0
      %94 = vmatprep.subr.bf16.mxu0 0
      %95 = vmatpush1.bf16.msra.mxu0 0
      %96 = vmatprep.subr.bf16.mxu0 0
      %97 = vmatpush1.bf16.msra.mxu0 0
      %98 = vmatprep.mubr.bf16.mxu0 0
      %99 = vmatmul.mubr.bf16.gmra.mrb[0].mxu0 %v64
      %v100 = vpop.f32.mrb[0].mxu0
      %v101 = vadd.f32 %v43, %v100
      %v102 = vpop.f32.mrb[0].mxu0
      %v103 = vpop.f32.mrb[0].mxu0
      %v104 = vadd.f32 %v43, %v103
      %v105 = vpop.f32.mrb[0].mxu0
      %106 = vdwg.mxu0
      %v107 = vmul.f32 %v101, 0.5
      %v108 = vmul.f32 %v104, 0.5
      %v109 = vmul.f32 %v101, 0.70710677
      %v110 = vmul.f32 %v104, 0.70710677
      %v111 = verf.f32.pop %v109
      %v112 = verf.f32.pop %v110
      %v113 = vadd.f32 %v111, 1.0
      %v114 = vadd.f32 %v112, 1.0
      %v115 = vmul.f32 %v107, %v113
      %v116 = vmul.f32 %v108, %v114
      %v117 = vsel %vm62, %v115, 0.0
      %118 = vadd.xlane.f32.xlu0 %v117
      %v119 = vpop.xlane.xlu0 %118
      %v120 = vsel %vm62, %v116, 0.0
      %121 = vadd.xlane.f32.xlu0 %v120
      %v122 = vpop.xlane.xlu0 %121
      %v123 = vrcp.pop 32.0
      %v124 = vmul.f32 %v119, %v123
      %v125 = vmul.f32 %v122, %v123
      %v126 = vmul.f32 %v115, %v115
      %v127 = vmul.f32 %v116, %v116
      %v128 = vsel %vm62, %v126, 0.0
      %129 = vadd.xlane.f32.xlu0 %v128
      %v130 = vpop.xlane.xlu0 %129
      %v131 = vsel %vm62, %v127, 0.0
      %132 = vadd.xlane.f32.xlu0 %v131
      %v133 = vpop.xlane.xlu0 %132
      %v134 = vmul.f32 %v130, %v123
      %v135 = vmul.f32 %v133, %v123
      %v136 = vmul.f32 %v124, %v124
      %v137 = vmul.f32 %v125, %v125
      %v138 = vsub.f32 %v134, %v136
      %v139 = vsub.f32 %v135, %v137
      %v140 = vmax.f32 %v138, 0.0
      %v141 = vmax.f32 %v139, 0.0
      %v142 = vsub.f32 %v115, %v124
      %v143 = vsub.f32 %v116, %v125
      %v144 = vadd.f32 %v140, 1e-12
      %v145 = vadd.f32 %v141, 1e-12
      %v146 = vrsqrt.pop %v144
      %v147 = vrsqrt.pop %v145
      %v148 = vmul.f32 %v142, %v146
      %v149 = vmul.f32 %v143, %v147
      %v150 = vld [vmem:[%s3] sm:$0x1]
      %v152 = vlaneseq
      %v153 = vshrl.u32 %v152, 7
      %v154 = vsub.s32 0, %v153
      %v155 = vrot.slane %v150, %v154
      %v157 = vmul.f32 %v148, %v155
      %v158 = vmul.f32 %v149, %v155
      %v159 = vld [vmem:[%s4] sm:$0x1]
      %v161 = vlaneseq
      %v162 = vshrl.u32 %v161, 7
      %v163 = vsub.s32 0, %v162
      %v164 = vrot.slane %v159, %v163
      %v166 = vadd.f32 %v157, %v164
      %v167 = vadd.f32 %v158, %v164
      %v168 = vpack.c.bf16 %v167, %v166
      %169 = vst.msk [vmem:[#allocation2] sm:$0xff] %vm62, %v168
    $region33: #{bert_pretraining_heads_without_pair.1} parent=1 // pred_fallthru
      _
    %v170 = vld [vmem:[#allocation2] sm:$0xff]
    %v171 = vld [vmem:[%s5] sm:$0xf]
    %v172 = vld [vmem:[%s5 + $0x4] sm:$0xf]
    %v173 = vld [vmem:[%s5 + $0x8] sm:$0xf]
    %v174 = vld [vmem:[%s5 + $0xc] sm:$0xf]
    %v175 = vld [vmem:[%s6] sm:$0x1]
    %v177 = vlaneseq
    %v178 = vshrl.u32 %v177, 7
    %v179 = vsub.s32 0, %v178
    %v180 = vrot.slane %v175, %v179
    %v186 = vunpack.c.l.b16 %v171
    %v187 = vunpack.c.l.b16 %v172
    %v188 = vunpack.c.l.b16 %v173
    %v189 = vunpack.c.l.b16 %v174
    %v190 = vpack.c.b16 %v187, %v186
    %v191 = vpack.c.b16 %v189, %v188
    %vm194 = vcmask 261120
    %v196 = vsel %vm194, %v170, 0
    %198 = vmatprep.subr.bf16.mxu0 0
    %199 = vmatpush1.bf16.msra.mxu0 %v190
    %200 = vmatprep.subr.bf16.mxu0 0
    %201 = vmatpush1.bf16.msra.mxu0 %v191
    %202 = vmatprep.subr.bf16.mxu0 0
    %203 = vmatpush1.bf16.msra.mxu0 0
    %204 = vmatprep.subr.bf16.mxu0 0
    %205 = vmatpush1.bf16.msra.mxu0 0
    %206 = vmatprep.subr.bf16.mxu0 0
    %207 = vmatpush1.bf16.msra.mxu0 0
    %208 = vmatprep.subr.bf16.mxu0 0
    %209 = vmatpush1.bf16.msra.mxu0 0
    %210 = vmatprep.subr.bf16.mxu0 0
    %211 = vmatpush1.bf16.msra.mxu0 0
    %212 = vmatprep.subr.bf16.mxu0 0
    %213 = vmatpush1.bf16.msra.mxu0 0
    %214 = vmatprep.subr.bf16.mxu0 0
    %215 = vmatpush1.bf16.msra.mxu0 0
    %216 = vmatprep.subr.bf16.mxu0 0
    %217 = vmatpush1.bf16.msra.mxu0 0
    %218 = vmatprep.subr.bf16.mxu0 0
    %219 = vmatpush1.bf16.msra.mxu0 0
    %220 = vmatprep.subr.bf16.mxu0 0
    %221 = vmatpush1.bf16.msra.mxu0 0
    %222 = vmatprep.subr.bf16.mxu0 0
    %223 = vmatpush1.bf16.msra.mxu0 0
    %224 = vmatprep.subr.bf16.mxu0 0
    %225 = vmatpush1.bf16.msra.mxu0 0
    %226 = vmatprep.subr.bf16.mxu0 0
    %227 = vmatpush1.bf16.msra.mxu0 0
    %228 = vmatprep.subr.bf16.mxu0 0
    %229 = vmatpush1.bf16.msra.mxu0 0
    %230 = vmatprep.mubr.bf16.mxu0 0
    %231 = vmatmul.mubr.bf16.gmra.mrb[0].mxu0 %v196
    %v232 = vpop.f32.mrb[0].mxu0
    %v233 = vadd.f32 %v180, %v232
    %v234 = vpop.f32.mrb[0].mxu0
    %v235 = vpop.f32.mrb[0].mxu0
    %v236 = vadd.f32 %v180, %v235
    %v237 = vpop.f32.mrb[0].mxu0
    %238 = vdwg.mxu0
    %v239 = vpack.c.bf16 %v236, %v233
    %v241 = vunpack.c.l.b16 %v239
    %v242 = vunpack.c.h.b16 %v239
    %v243 = vpack.c.b16 %v241, %v241
    %v244 = vpack.c.b16 %v242, %v242
    %247 = vst [vmem:[#allocation3] sm:$0xf] %v243
    %248 = vst [vmem:[#allocation3 + $0x4] sm:$0xf] %v244
    // Predicated region
    $region34: #{bert_pretraining_heads_without_pair.1} parent=1 // pred_check
      _
    $region35: #{bert_pretraining_heads_without_pair.1} parent=1 // pred_check_branch
      %250 = sbr.rel (0) target = $region37
    $region36: #{bert_pretraining_heads_without_pair.1} parent=1 // pred_region
      %s252 = ssub.s32 128, 128
      %253 = vsyncadd [#allocation4], %s252
      %s254 = sshll.u32 [#allocation3], 4
      %s255 = int_to_ptr.vmem [resolvable:$true] %s254
      %260 = dma.vmem_to_hbm [thread:$0]  %s255, 128, %s7, [#allocation4], 64, 64, 4
    $region37: #{bert_pretraining_heads_without_pair.1} parent=1 // pred_fallthru
      _
    // Predicated region
    $region38: #{bert_pretraining_heads_without_pair.1} parent=1 // pred_check
      _
    $region39: #{bert_pretraining_heads_without_pair.1} parent=1 // pred_check_branch
      %262 = sbr.rel (0) target = $region41
    $region40: #{bert_pretraining_heads_without_pair.1} parent=1 // pred_region
      %263 = dma.done [#allocation4], 128
    $region41: #{bert_pretraining_heads_without_pair.1} parent=1 // pred_fallthru
      _
    %264 = vsyncpa [#allocation4], 1

// kernel: bert_pretraining_heads_without_pair.1
$region0: #{bert_pretraining_heads_without_pair.1}
  #allocation0 [shape = 'u32[]', space=smem, size = 0x4, offset = 0x4, fixed_abs, tag = 'smem constant byte address 0x4 - core index']
  #allocation1 [shape = 'u32[144,128]{1,0:T(1,128)}', space=vmem, size = 0x12000, scoped, tag = 'internal scratch']
  #allocation2 [shape = 'bf16[16,32]{1,0:T(16,128)(2,1)}', space=vmem, size = 0x1000, scoped, tag = 'scratch operand']
  %s0 = inlined_call_operand.vmem [shape: bf16[16,32], index: 0, kind: input, shape index: {}]
  %s1 = inlined_call_operand.vmem [shape: bf16[32,32], index: 1, kind: input, shape index: {}]
  %s2 = inlined_call_operand.vmem [shape: f32[1,32], index: 2, kind: input, shape index: {}]
  %s3 = inlined_call_operand.vmem [shape: f32[1,32], index: 3, kind: input, shape index: {}]
  %s4 = inlined_call_operand.vmem [shape: f32[1,32], index: 4, kind: input, shape index: {}]
  %s5 = inlined_call_operand.vmem [shape: bf16[32,128], index: 5, kind: input, shape index: {}]
  %s6 = inlined_call_operand.vmem [shape: f32[1,128], index: 6, kind: input, shape index: {}]
  %s7 = inlined_call_operand.hbm [shape: bf16[16,128], index: 7, kind: output, shape index: {}]
  %s8 = sld [smem:[#allocation0]]
  $region42: #{bert_pretraining_heads_without_pair.1} parent=0
    _
  %s10 = ssub.s32 1, %s8
  %s11 = scalar_select 0, %s10, %s8
  $region1: #{bert_pretraining_heads_without_pair.1} parent=0
    #allocation3 [shape = 'u8[4096]{0}', space=vmem, size = 0x1000, scoped, tag = 'output window, operand 0, single buffered']
    #allocation4 [shape = 's32[1]{0}', space=sflag, size = 0x4, scoped, tag = 'scoped memory for bert_pretraining_heads_without_pair.1']
    %12 = vsyncpa [#allocation4], 0
    // Predicated region
    $region2: #{bert_pretraining_heads_without_pair.1} parent=1 // pred_check
      _
    $region3: #{bert_pretraining_heads_without_pair.1} parent=1 // pred_check_branch
      %14 = sbr.rel (0) target = $region5
    $region4: #{bert_pretraining_heads_without_pair.1} parent=1 // pred_region
      _
    $region5: #{bert_pretraining_heads_without_pair.1} parent=1 // pred_fallthru
      _
    // Predicated region
    $region6: #{bert_pretraining_heads_without_pair.1} parent=1 // pred_check
      _
    $region7: #{bert_pretraining_heads_without_pair.1} parent=1 // pred_check_branch
      %16 = sbr.rel (0) target = $region9
    $region8: #{bert_pretraining_heads_without_pair.1} parent=1 // pred_region
      _
    $region9: #{bert_pretraining_heads_without_pair.1} parent=1 // pred_fallthru
      _
    // Predicated region
    $region10: #{bert_pretraining_heads_without_pair.1} parent=1 // pred_check
      _
    $region11: #{bert_pretraining_heads_without_pair.1} parent=1 // pred_check_branch
      %18 = sbr.rel (0) target = $region13
    $region12: #{bert_pretraining_heads_without_pair.1} parent=1 // pred_region
      _
    $region13: #{bert_pretraining_heads_without_pair.1} parent=1 // pred_fallthru
      _
    // Predicated region
    $region14: #{bert_pretraining_heads_without_pair.1} parent=1 // pred_check
      _
    $region15: #{bert_pretraining_heads_without_pair.1} parent=1 // pred_check_branch
      %20 = sbr.rel (0) target = $region17
    $region16: #{bert_pretraining_heads_without_pair.1} parent=1 // pred_region
      _
    $region17: #{bert_pretraining_heads_without_pair.1} parent=1 // pred_fallthru
      _
    // Predicated region
    $region18: #{bert_pretraining_heads_without_pair.1} parent=1 // pred_check
      _
    $region19: #{bert_pretraining_heads_without_pair.1} parent=1 // pred_check_branch
      %22 = sbr.rel (0) target = $region21
    $region20: #{bert_pretraining_heads_without_pair.1} parent=1 // pred_region
      _
    $region21: #{bert_pretraining_heads_without_pair.1} parent=1 // pred_fallthru
      _
    // Predicated region
    $region22: #{bert_pretraining_heads_without_pair.1} parent=1 // pred_check
      _
    $region23: #{bert_pretraining_heads_without_pair.1} parent=1 // pred_check_branch
      %24 = sbr.rel (0) target = $region25
    $region24: #{bert_pretraining_heads_without_pair.1} parent=1 // pred_region
      _
    $region25: #{bert_pretraining_heads_without_pair.1} parent=1 // pred_fallthru
      _
    // Predicated region
    $region26: #{bert_pretraining_heads_without_pair.1} parent=1 // pred_check
      _
    $region27: #{bert_pretraining_heads_without_pair.1} parent=1 // pred_check_branch
      %26 = sbr.rel (0) target = $region29
    $region28: #{bert_pretraining_heads_without_pair.1} parent=1 // pred_region
      _
    $region29: #{bert_pretraining_heads_without_pair.1} parent=1 // pred_fallthru
      _
    %p28 = scmp.eq.s32.totalorder 0, 0
    // Predicated region
    $region30: #{bert_pretraining_heads_without_pair.1} parent=1 // pred_check
      %p29 = pneg %p28
    $region31: #{bert_pretraining_heads_without_pair.1} parent=1 // pred_check_branch
      %31 = sbr.rel (%p29) target = $region33
    $region32: #{bert_pretraining_heads_without_pair.1} parent=1 // pred_region
      %v32 = vld [vmem:[%s0] sm:$0xf]
      %v33 = vld [vmem:[%s0 + $0x4] sm:$0xf]
      %v34 = vld [vmem:[%s1] sm:$0xf]
      %v35 = vld [vmem:[%s1 + $0x4] sm:$0xf]
      %v36 = vld [vmem:[%s1 + $0x8] sm:$0xf]
      %v37 = vld [vmem:[%s1 + $0xc] sm:$0xf]
      %v38 = vld [vmem:[%s2] sm:$0x1]
      %v40 = vlaneseq
      %v41 = vshrl.u32 %v40, 7
      %v42 = vsub.s32 0, %v41
      %v43 = vrot.slane %v38, %v42
      %v47 = vunpack.c.l.b16 %v32
      %v48 = vunpack.c.l.b16 %v33
      %v49 = vpack.c.b16 %v48, %v47
      %v54 = vunpack.c.l.b16 %v34
      %v55 = vunpack.c.l.b16 %v35
      %v56 = vunpack.c.l.b16 %v36
      %v57 = vunpack.c.l.b16 %v37
      %v58 = vpack.c.b16 %v55, %v54
      %v59 = vpack.c.b16 %v57, %v56
      %vm62 = vcmask 261120
      %v64 = vsel %vm62, %v49, 0
      %66 = vmatprep.subr.bf16.mxu0 0
      %67 = vmatpush1.bf16.msra.mxu0 %v58
      %68 = vmatprep.subr.bf16.mxu0 0
      %69 = vmatpush1.bf16.msra.mxu0 %v59
      %70 = vmatprep.subr.bf16.mxu0 0
      %71 = vmatpush1.bf16.msra.mxu0 0
      %72 = vmatprep.subr.bf16.mxu0 0
      %73 = vmatpush1.bf16.msra.mxu0 0
      %74 = vmatprep.subr.bf16.mxu0 0
      %75 = vmatpush1.bf16.msra.mxu0 0
      %76 = vmatprep.subr.bf16.mxu0 0
      %77 = vmatpush1.bf16.msra.mxu0 0
      %78 = vmatprep.subr.bf16.mxu0 0
      %79 = vmatpush1.bf16.msra.mxu0 0
      %80 = vmatprep.subr.bf16.mxu0 0
      %81 = vmatpush1.bf16.msra.mxu0 0
      %82 = vmatprep.subr.bf16.mxu0 0
      %83 = vmatpush1.bf16.msra.mxu0 0
      %84 = vmatprep.subr.bf16.mxu0 0
      %85 = vmatpush1.bf16.msra.mxu0 0
      %86 = vmatprep.subr.bf16.mxu0 0
      %87 = vmatpush1.bf16.msra.mxu0 0
      %88 = vmatprep.subr.bf16.mxu0 0
      %89 = vmatpush1.bf16.msra.mxu0 0
      %90 = vmatprep.subr.bf16.mxu0 0
      %91 = vmatpush1.bf16.msra.mxu0 0
      %92 = vmatprep.subr.bf16.mxu0 0
      %93 = vmatpush1.bf16.msra.mxu0 0
      %94 = vmatprep.subr.bf16.mxu0 0
      %95 = vmatpush1.bf16.msra.mxu0 0
      %96 = vmatprep.subr.bf16.mxu0 0
      %97 = vmatpush1.bf16.msra.mxu0 0
      %98 = vmatprep.mubr.bf16.mxu0 0
      %99 = vmatmul.mubr.bf16.gmra.mrb[0].mxu0 %v64
      %v100 = vpop.f32.mrb[0].mxu0
      %v101 = vadd.f32 %v43, %v100
      %v102 = vpop.f32.mrb[0].mxu0
      %v103 = vpop.f32.mrb[0].mxu0
      %v104 = vadd.f32 %v43, %v103
      %v105 = vpop.f32.mrb[0].mxu0
      %106 = vdwg.mxu0
      %v107 = vmul.f32 %v101, 0.5
      %v108 = vmul.f32 %v104, 0.5
      %v109 = vmul.f32 %v101, 0.70710677
      %v110 = vmul.f32 %v104, 0.70710677
      %v111 = verf.f32.pop %v109
      %v112 = verf.f32.pop %v110
      %v113 = vadd.f32 %v111, 1.0
      %v114 = vadd.f32 %v112, 1.0
      %v115 = vmul.f32 %v107, %v113
      %v116 = vmul.f32 %v108, %v114
      %v117 = vsel %vm62, %v115, 0.0
      %118 = vadd.xlane.f32.xlu0 %v117
      %v119 = vpop.xlane.xlu0 %118
      %v120 = vsel %vm62, %v116, 0.0
      %121 = vadd.xlane.f32.xlu0 %v120
      %v122 = vpop.xlane.xlu0 %121
      %v123 = vrcp.pop 32.0
      %v124 = vmul.f32 %v119, %v123
      %v125 = vmul.f32 %v122, %v123
      %v126 = vmul.f32 %v115, %v115
      %v127 = vmul.f32 %v116, %v116
      %v128 = vsel %vm62, %v126, 0.0
      %129 = vadd.xlane.f32.xlu0 %v128
      %v130 = vpop.xlane.xlu0 %129
      %v131 = vsel %vm62, %v127, 0.0
      %132 = vadd.xlane.f32.xlu0 %v131
      %v133 = vpop.xlane.xlu0 %132
      %v134 = vmul.f32 %v130, %v123
      %v135 = vmul.f32 %v133, %v123
      %v136 = vmul.f32 %v124, %v124
      %v137 = vmul.f32 %v125, %v125
      %v138 = vsub.f32 %v134, %v136
      %v139 = vsub.f32 %v135, %v137
      %v140 = vmax.f32 %v138, 0.0
      %v141 = vmax.f32 %v139, 0.0
      %v142 = vsub.f32 %v115, %v124
      %v143 = vsub.f32 %v116, %v125
      %v144 = vadd.f32 %v140, 1e-12
      %v145 = vadd.f32 %v141, 1e-12
      %v146 = vrsqrt.pop %v144
      %v147 = vrsqrt.pop %v145
      %v148 = vmul.f32 %v142, %v146
      %v149 = vmul.f32 %v143, %v147
      %v150 = vld [vmem:[%s3] sm:$0x1]
      %v152 = vlaneseq
      %v153 = vshrl.u32 %v152, 7
      %v154 = vsub.s32 0, %v153
      %v155 = vrot.slane %v150, %v154
      %v157 = vmul.f32 %v148, %v155
      %v158 = vmul.f32 %v149, %v155
      %v159 = vld [vmem:[%s4] sm:$0x1]
      %v161 = vlaneseq
      %v162 = vshrl.u32 %v161, 7
      %v163 = vsub.s32 0, %v162
      %v164 = vrot.slane %v159, %v163
      %v166 = vadd.f32 %v157, %v164
      %v167 = vadd.f32 %v158, %v164
      %v168 = vpack.c.bf16 %v167, %v166
      %169 = vst.msk [vmem:[#allocation2] sm:$0xff] %vm62, %v168
    $region33: #{bert_pretraining_heads_without_pair.1} parent=1 // pred_fallthru
      _
    %v170 = vld [vmem:[#allocation2] sm:$0xff]
    %v171 = vld [vmem:[%s5] sm:$0xf]
    %v172 = vld [vmem:[%s5 + $0x4] sm:$0xf]
    %v173 = vld [vmem:[%s5 + $0x8] sm:$0xf]
    %v174 = vld [vmem:[%s5 + $0xc] sm:$0xf]
    %v175 = vld [vmem:[%s6] sm:$0x1]
    %v177 = vlaneseq
    %v178 = vshrl.u32 %v177, 7
    %v179 = vsub.s32 0, %v178
    %v180 = vrot.slane %v175, %v179
    %v186 = vunpack.c.l.b16 %v171
    %v187 = vunpack.c.l.b16 %v172
    %v188 = vunpack.c.l.b16 %v173
    %v189 = vunpack.c.l.b16 %v174
    %v190 = vpack.c.b16 %v187, %v186
    %v191 = vpack.c.b16 %v189, %v188
    %vm194 = vcmask 261120
    %v196 = vsel %vm194, %v170, 0
    %198 = vmatprep.subr.bf16.mxu0 0
    %199 = vmatpush1.bf16.msra.mxu0 %v190
    %200 = vmatprep.subr.bf16.mxu0 0
    %201 = vmatpush1.bf16.msra.mxu0 %v191
    %202 = vmatprep.subr.bf16.mxu0 0
    %203 = vmatpush1.bf16.msra.mxu0 0
    %204 = vmatprep.subr.bf16.mxu0 0
    %205 = vmatpush1.bf16.msra.mxu0 0
    %206 = vmatprep.subr.bf16.mxu0 0
    %207 = vmatpush1.bf16.msra.mxu0 0
    %208 = vmatprep.subr.bf16.mxu0 0
    %209 = vmatpush1.bf16.msra.mxu0 0
    %210 = vmatprep.subr.bf16.mxu0 0
    %211 = vmatpush1.bf16.msra.mxu0 0
    %212 = vmatprep.subr.bf16.mxu0 0
    %213 = vmatpush1.bf16.msra.mxu0 0
    %214 = vmatprep.subr.bf16.mxu0 0
    %215 = vmatpush1.bf16.msra.mxu0 0
    %216 = vmatprep.subr.bf16.mxu0 0
    %217 = vmatpush1.bf16.msra.mxu0 0
    %218 = vmatprep.subr.bf16.mxu0 0
    %219 = vmatpush1.bf16.msra.mxu0 0
    %220 = vmatprep.subr.bf16.mxu0 0
    %221 = vmatpush1.bf16.msra.mxu0 0
    %222 = vmatprep.subr.bf16.mxu0 0
    %223 = vmatpush1.bf16.msra.mxu0 0
    %224 = vmatprep.subr.bf16.mxu0 0
    %225 = vmatpush1.bf16.msra.mxu0 0
    %226 = vmatprep.subr.bf16.mxu0 0
    %227 = vmatpush1.bf16.msra.mxu0 0
    %228 = vmatprep.subr.bf16.mxu0 0
    %229 = vmatpush1.bf16.msra.mxu0 0
    %230 = vmatprep.mubr.bf16.mxu0 0
    %231 = vmatmul.mubr.bf16.gmra.mrb[0].mxu0 %v196
    %v232 = vpop.f32.mrb[0].mxu0
    %v233 = vadd.f32 %v180, %v232
    %v234 = vpop.f32.mrb[0].mxu0
    %v235 = vpop.f32.mrb[0].mxu0
    %v236 = vadd.f32 %v180, %v235
    %v237 = vpop.f32.mrb[0].mxu0
    %238 = vdwg.mxu0
    %v239 = vpack.c.bf16 %v236, %v233
    %v241 = vunpack.c.l.b16 %v239
    %v242 = vunpack.c.h.b16 %v239
    %v243 = vpack.c.b16 %v241, %v241
    %v244 = vpack.c.b16 %v242, %v242
    %247 = vst [vmem:[#allocation3] sm:$0xf] %v243
    %248 = vst [vmem:[#allocation3 + $0x4] sm:$0xf] %v244
    // Predicated region
    $region34: #{bert_pretraining_heads_without_pair.1} parent=1 // pred_check
      _
    $region35: #{bert_pretraining_heads_without_pair.1} parent=1 // pred_check_branch
      %250 = sbr.rel (0) target = $region37
    $region36: #{bert_pretraining_heads_without_pair.1} parent=1 // pred_region
      %s252 = ssub.s32 128, 128
      %253 = vsyncadd [#allocation4], %s252
      %s254 = sshll.u32 [#allocation3], 4
      %s255 = int_to_ptr.vmem [resolvable:$true] %s254
      %260 = dma.vmem_to_hbm [thread:$0]  %s255, 128, %s7, [#allocation4], 64, 64, 4
    $region37: #{bert_pretraining_heads_without_pair.1} parent=1 // pred_fallthru
      _
    // Predicated region
    $region38: #{bert_pretraining_heads_without_pair.1} parent=1 // pred_check
      _
    $region39: #{bert_pretraining_heads_without_pair.1} parent=1 // pred_check_branch
      %262 = sbr.rel (0) target = $region41
    $region40: #{bert_pretraining_heads_without_pair.1} parent=1 // pred_region
      %263 = dma.done [#allocation4], 128
    $region41: #{bert_pretraining_heads_without_pair.1} parent=1 // pred_fallthru
      _
    %264 = vsyncpa [#allocation4], 1

</llo_original>
